<compile_context>
chip_gen: v7x
topology: tpu7x:2x2x1
jax: 0.10.0
libtpu: 0.0.40
codegen_flags: <defaults>
</compile_context>

<pallas_src>
import jax
import jax.numpy as jnp
from jax.experimental import pallas as pl
from jax.experimental.pallas import tpu as pltpu

# Below this, pallas_call launch cost dominates a copy; use the metadata path.
_MIN_KERNEL_BYTES = 1024


def _hbm_copy_kernel(x_hbm, o_hbm, sem):
    """Whole-array HBM->HBM DMA copy — no VMEM bounce, no vld/vst slots."""
    cp = pltpu.make_async_copy(x_hbm, o_hbm, sem)
    cp.start()
    cp.wait()


def _choose_2d(size: int) -> tuple[int, int]:
    """Pick a (rows, cols) factorization of `size` for the copy view.

    A multiple-of-128 column count is preferred (nice DMA tiling); with the
    HBM->HBM DMA path the fallback is no longer a lane-masking perf cliff.
    """
    for n in (1024, 512, 256, 128):
        if size % n == 0:
            return size // n, n
    for n in range(min(size, 1024), 0, -1):
        if size % n == 0:
            return size // n, n
    return 1, size  # unreachable: n == 1 always divides


def _pallas_materialized_copy(x2d: jax.Array) -> jax.Array:
    """One pallas_call doing a single direct HBM->HBM DMA of the whole array."""
    M, N = x2d.shape
    nbytes = M * N * x2d.dtype.itemsize
    return pl.pallas_call(
        _hbm_copy_kernel,
        out_shape=jax.ShapeDtypeStruct((M, N), x2d.dtype),
        in_specs=[pl.BlockSpec(memory_space=pl.ANY)],   # raw HBM ref, no auto-DMA
        out_specs=pl.BlockSpec(memory_space=pl.ANY),    # raw HBM ref
        scratch_shapes=[pltpu.SemaphoreType.DMA],
        cost_estimate=pl.CostEstimate(
            flops=0, transcendentals=0, bytes_accessed=2 * nbytes),
    )(x2d)


def _torch_squeeze_shape(shape, dimension):
    """Replicate torch.Tensor.squeeze shape semantics."""
    shape = tuple(shape)
    if dimension is None:
        return tuple(d for d in shape if d != 1)
    ndim = len(shape)
    if ndim == 0:
        # torch treats 0-d tensors as having dim range [-1, 0]; always a no-op.
        if dimension in (0, -1):
            return shape
        raise ValueError(f"dimension {dimension} out of range for rank 0")
    dim = dimension + ndim if dimension < 0 else dimension
    if not (0 <= dim < ndim):
        raise ValueError(f"dimension {dimension} out of range for rank {ndim}")
    if shape[dim] != 1:
        return shape  # torch: squeezing a non-size-1 dim is a no-op
    return shape[:dim] + shape[dim + 1:]


def squeeze(x: jax.Array, dimension: int | None = None,
            materialize: bool = False) -> jax.Array:
    """Forward pass of the Squeeze module.

    Default (materialize=False) is the metadata-only path — squeeze moves no
    data.  materialize=True forces a real copy via a single HBM->HBM DMA.
    """
    out_shape = _torch_squeeze_shape(x.shape, dimension)

    small = x.size * x.dtype.itemsize < _MIN_KERNEL_BYTES
    if not materialize or x.size == 0 or x.ndim == 0 or small:
        return jnp.reshape(x, out_shape)

    M, N = _choose_2d(x.size)
    y2d = _pallas_materialized_copy(jnp.reshape(x, (M, N)))
    return jnp.reshape(y2d, out_shape)


class Squeeze:
    """Drop-in analogue of the PyTorch nn.Module."""

    def __init__(self, dimension: int | None = None, materialize: bool = False):
        self.dimension = dimension
        self.materialize = materialize

    def __call__(self, x_in: jax.Array) -> jax.Array:
        return squeeze(x_in, self.dimension, self.materialize)


if __name__ == "__main__":
    key = jax.random.PRNGKey(0)
    k1, k2, k3, k4, k5 = jax.random.split(key, 5)

    # Case 1 (default metadata path): squeeze dim 1: (2,1,16,16) -> (2,16,16)
    x1 = jax.random.normal(k1, (2, 1, 16, 16), dtype=jnp.float32)
    y1 = jax.block_until_ready(Squeeze(dimension=1)(x1))
    assert y1.shape == (2, 16, 16), y1.shape
    assert jnp.array_equal(y1, jnp.squeeze(x1, axis=1))

    # Case 2: dimension=None squeezes all size-1 dims: (2,1,4,1,16) -> (2,4,16)
    x2 = jax.random.normal(k2, (2, 1, 4, 1, 16), dtype=jnp.float32)
    y2 = jax.block_until_ready(Squeeze()(x2))
    assert y2.shape == (2, 4, 16), y2.shape
    assert jnp.array_equal(y2, jnp.squeeze(x2))

    # Case 3: torch no-op rule — dimension points at a non-size-1 dim
    x3 = jax.random.normal(k3, (2, 4, 16, 16), dtype=jnp.float32)
    y3 = jax.block_until_ready(Squeeze(dimension=0)(x3))
    assert y3.shape == (2, 4, 16, 16), y3.shape
    assert jnp.array_equal(y3, x3)

    # Case 4: forced materialization on a small tensor — exercises the
    # HBM->HBM DMA Pallas kernel (2 KiB >= _MIN_KERNEL_BYTES).
    y4 = jax.block_until_ready(squeeze(x1, dimension=1, materialize=True))
    assert y4.shape == (2, 16, 16), y4.shape
    assert jnp.array_equal(y4, jnp.squeeze(x1, axis=1))

    # Case 5: forced materialization on a larger tensor with a lane-friendly
    # (rows, 1024) copy view: (2,1,128,256) f32 = 256 KiB.
    x5 = jax.random.normal(k4, (2, 1, 128, 256), dtype=jnp.float32)
    y5 = jax.block_until_ready(squeeze(x5, dimension=1, materialize=True))
    assert y5.shape == (2, 128, 256), y5.shape
    assert jnp.array_equal(y5, jnp.squeeze(x5, axis=1))

    # Case 6: zero-size and 0-d inputs bypass the kernel.
    x6 = jnp.zeros((2, 1, 0, 4), dtype=jnp.float32)
    y6 = jax.block_until_ready(squeeze(x6, materialize=True))
    assert y6.shape == (2, 0, 4), y6.shape
    x7 = jnp.array(3.0, dtype=jnp.float32)
    y7 = jax.block_until_ready(squeeze(x7, materialize=True))
    assert y7.shape == (), y7.shape

    print("KERNEL_OK")
</pallas_src>

<mosaic_0001>
module attributes {stable_mosaic.version = 11 : i64} {
  func.func @_hbm_copy_kernel(%arg0: memref<1x512xf32, #tpu.memory_space<any>>, %arg1: memref<1x512xf32, #tpu.memory_space<any>>, %arg2: memref<!tpu.dma_semaphore, #tpu.memory_space<semaphore_mem>>) attributes {dimension_semantics = [], scalar_prefetch = 0 : i64, scratch_operands = 1 : i64, tpu.core_type = #tpu.core_type<tc>} {
    tpu.enqueue_dma source(%arg0 : memref<1x512xf32, #tpu.memory_space<any>>) target(%arg1 : memref<1x512xf32, #tpu.memory_space<any>>) target_semaphore(%arg2 : memref<!tpu.dma_semaphore, #tpu.memory_space<semaphore_mem>>)
    tpu.wait_dma2 semaphore(%arg2 : memref<!tpu.dma_semaphore, #tpu.memory_space<semaphore_mem>>) src(%arg0 : memref<1x512xf32, #tpu.memory_space<any>>) dst(%arg1 : memref<1x512xf32, #tpu.memory_space<any>>)
    return
  }
}

</mosaic_0001>

<llo_original>
// kernel: tpu_custom_call.1
$region0: #{tpu_custom_call.1}
  #allocation0 [shape = 'u32[]', space=smem, size = 0x4, offset = 0x4, fixed_abs, tag = 'smem constant byte address 0x4 - core index']
  #allocation1 [shape = 'u32[144,128]{1,0:T(1,128)}', space=vmem, size = 0x12000, scoped, tag = 'internal scratch']
  #allocation2 [shape = 's32[1]{0}', space=sflag, size = 0x4, scoped, tag = 'scratch operand']
  #allocation3 [shape = 's32[]', space=sflag, size = 0x4, offset = 0, fixed_abs, tag = 'sflag constant byte address 0x0 - dummy sync flag']
  #allocation4 [shape = 'u32[0]{0}', space=smem, size = 0, offset = 0, fixed_abs, tag = 'smem constant byte address 0x0 - null']
  %s0 = inlined_call_operand.hbm [shape: f32[1,512], index: 0, kind: input, shape index: {}]
  %s1 = inlined_call_operand.hbm [shape: f32[1,512], index: 1, kind: output, shape index: {}]
  %s2 = sld [smem:[#allocation0]]
  $region2: #{tpu_custom_call.1} parent=0
    _
  %s4 = ssub.s32 1, %s2
  %s5 = scalar_select 0, %s4, %s2
  %s7 = sshll.u32 1, 14
  %s8 = sxor.u32 4294967295, %s7
  %s11 = sshll.u32 3, 24
  %s12 = sxor.u32 4294967295, %s11
  %s13 = sand.u32 0, %s12
  %s15 = sor.u32 %s13, 0
  %18 = dma.general %s0, 64, %s1, [#allocation2], [#allocation3], [#allocation4], %s15, 0
  %s19 = smul.u32 1, 4
  %s20 = sshll.u32 %s19, 4
  %21 = dma.done [#allocation2], %s20
  %22 = vsyncmov [#allocation2]
  %s23 = vpop.sfrf %22
  %p24 = scmp.eq.s32.totalorder %s23, 0
  %p25 = pneg %p24
  %27 = shalt.err (%p25)

</llo_original>
